<compile_context>
chip_gen: v7x
topology: tpu7x:2x2x1
jax: 0.10.0
libtpu: 0.0.40
codegen_flags: <defaults>
</compile_context>

<pallas_src>
import random

import jax
import jax.numpy as jnp
import numpy as np
from jax.experimental import pallas as pl
from jax.experimental.pallas import tpu as pltpu


def _round_up(x: int, m: int) -> int:
    return ((x + m - 1) // m) * m


def _make_reverb_kernel(tn: int, n_kk: int, tail_w: int):
    """Kernel closure.  Grid = (row_tiles, n_tiles, n_kk); kk innermost.

    x_ref:    (TR, TN)        padded-waveform block j+kk
    band_ref: (BAND_ROWS, TN) VMEM-resident Toeplitz band (constant index map)
    o_ref:    (TR, TN)        output tile in the caller's dtype (written once)
    acc_ref:  (TR, TN)        f32 scratch accumulator
    """
    tail0 = (n_kk - 1) * tn  # static row offset of the (trimmed) last chunk

    def kernel(x_ref, band_ref, o_ref, acc_ref):
        kk = pl.program_id(2)

        @pl.when(kk == 0)
        def _init():
            acc_ref[...] = jnp.zeros_like(acc_ref)

        # Full-width contraction for every band chunk but the last.
        @pl.when(kk < n_kk - 1)
        def _full_step():
            off = pl.multiple_of(kk * tn, tn)
            acc_ref[...] += jnp.dot(
                x_ref[...],
                band_ref[pl.ds(off, tn), :],
                preferred_element_type=jnp.float32,
            )

        # Last chunk: only `tail_w` band rows can be non-zero, so the
        # contraction is trimmed (static slice) and the result is cast + stored
        # directly into the output tile (no extra wrapper pass).
        @pl.when(kk == n_kk - 1)
        def _tail_step():
            acc_ref[...] += jnp.dot(
                x_ref[:, :tail_w],
                band_ref[tail0:tail0 + tail_w, :],
                preferred_element_type=jnp.float32,
            )
            o_ref[...] = acc_ref[...].astype(o_ref.dtype)

    return kernel


def _build_band(impulse: jnp.ndarray, tn: int, band_rows: int, dtype) -> jnp.ndarray:
    """Shift-invariant Toeplitz band, shape (band_rows, tn).

    band[v, m] = impulse[m + K - 1 - v] if 0 <= m + K - 1 - v < K else 0,
    so that for every output tile starting at n0 = j*tn:
        out[:, n0 + m] = sum_v xp[:, j*tn + v] * band[v, m]
    where xp is the waveform shifted right by K-1 and zero padded.
    """
    K = impulse.shape[0]
    v = jnp.arange(band_rows)[:, None]     # (band_rows, 1)
    m = jnp.arange(tn)[None, :]            # (1, tn)
    d = m + (K - 1) - v                    # (band_rows, tn)
    valid = (d >= 0) & (d < K)
    g = jnp.take(impulse, jnp.clip(d, 0, K - 1), axis=0)
    return jnp.where(valid, g, 0).astype(dtype)


def reverb_fftconvolve_pallas(waveform: jnp.ndarray, impulse: jnp.ndarray, *,
                              row_tile: int = 128, tn: int = 256,
                              operand_dtype=jnp.float32) -> jnp.ndarray:
    """Full 1-D convolution of `waveform` (..., L) with 1-D `impulse` (K,)."""
    assert tn % 128 == 0, "tn must be a multiple of 128 (lane width)"
    assert row_tile % 8 == 0, "row_tile must be a multiple of 8 (sublane width)"
    orig_shape = waveform.shape
    orig_dtype = waveform.dtype
    L = orig_shape[-1]
    K = impulse.shape[0]
    assert K >= 1 and L >= 1
    N = L + K - 1

    x = waveform.reshape(-1, L).astype(operand_dtype)   # (R, L)
    R = x.shape[0]

    # Row tile: up to `row_tile` (128 keeps the MXU full), always a multiple of
    # 8; r_pad == R whenever R is already a multiple of 8 and <= row_tile.
    tr = min(row_tile, _round_up(R, 8))
    r_pad = _round_up(R, tr)

    # Output tiling along N (lane-dense stores) and band-chunk count.
    n_tiles = pl.cdiv(N, tn)
    n_pad = n_tiles * tn
    n_kk = 1 + pl.cdiv(K - 1, tn)              # TN-wide band chunks per tile
    tail_nz = tn + K - 1 - (n_kk - 1) * tn     # non-zero rows in last chunk, (0, tn]
    tail_w = min(tn, _round_up(tail_nz, 128))  # lane-aligned trimmed tail width
    band_rows = (n_kk - 1) * tn + tail_w
    lp = (n_tiles + n_kk - 1) * tn             # padded input time length

    op_itemsize = jnp.dtype(operand_dtype).itemsize
    out_itemsize = jnp.dtype(orig_dtype).itemsize

    # Single pad op: rows to r_pad; time axis shifted right by K-1 (makes the
    # band shift-invariant) and zero padded on the right to `lp`.
    xp = jnp.pad(x, ((0, r_pad - R), (K - 1, lp - (K - 1) - L)))

    band = _build_band(impulse, tn, band_rows, operand_dtype)   # (band_rows, tn)

    # VMEM budget: band / x / out double-buffered + f32 accumulator + slack.
    vmem_est = (2 * band_rows * tn * op_itemsize
                + 2 * tr * tn * op_itemsize
                + 2 * tr * tn * out_itemsize
                + tr * tn * 4
                + (1 << 20))
    assert vmem_est <= 48 * 1024 * 1024, (
        f"impulse too long for a fully VMEM-resident band (~{vmem_est} bytes); "
        "chunk the band over kk (TODO) or reduce tn")
    vmem_limit = int(max(32 * 1024 * 1024, vmem_est))

    grid = (r_pad // tr, n_tiles, n_kk)
    cost = pl.CostEstimate(
        flops=2 * r_pad * n_pad * band_rows,
        transcendentals=0,
        bytes_accessed=(xp.size * op_itemsize
                        + band.size * op_itemsize
                        + r_pad * n_pad * out_itemsize),
    )

    out = pl.pallas_call(
        _make_reverb_kernel(tn, n_kk, tail_w),
        out_shape=jax.ShapeDtypeStruct((r_pad, n_pad), orig_dtype),
        grid_spec=pltpu.PrefetchScalarGridSpec(
            num_scalar_prefetch=0,
            grid=grid,
            in_specs=[
                # Waveform: time blocks j .. j+n_kk-1 feed output tile j; with
                # n_kk == 2 consecutive grid steps reuse the same block, so
                # Pallas skips the re-DMA and x traffic stays ~1x.
                pl.BlockSpec((tr, tn), lambda i, j, kk: (i, j + kk)),
                # Toeplitz band: full-array block, constant index map -> DMA'd
                # from HBM exactly once, VMEM-resident for the whole grid.
                pl.BlockSpec((band_rows, tn), lambda i, j, kk: (0, 0)),
            ],
            out_specs=pl.BlockSpec((tr, tn), lambda i, j, kk: (i, j)),
            scratch_shapes=[pltpu.VMEM((tr, tn), jnp.float32)],
        ),
        compiler_params=pltpu.CompilerParams(
            dimension_semantics=("parallel", "parallel", "arbitrary"),
            vmem_limit_bytes=vmem_limit,
        ),
        cost_estimate=cost,
    )(xp, band)

    return out[:R, :N].reshape(*orig_shape[:-1], N)


class Reverb:
    """JAX/Pallas port of the PyTorch Reverb augmentation module."""

    def __init__(self, impulse_sample: jnp.ndarray, p: float = 0.5, seed: int = 0):
        self._impulse = impulse_sample
        self.p = p
        # TODO(synk): host-side stochastic gate, mirroring `random.random()` in
        # the torch module (not a kernel-level op).
        self._rng = random.Random(seed)

    def __call__(self, waveform: jnp.ndarray) -> jnp.ndarray:
        if self._rng.random() < self.p:
            return reverb_fftconvolve_pallas(waveform, self._impulse)
        return waveform


if __name__ == "__main__":
    key = jax.random.PRNGKey(0)
    k_wave, k_imp, k_wave2, k_imp2 = jax.random.split(key, 4)

    B, C, L, K = 2, 4, 128, 33            # waveform (B, C, L), impulse (K,)
    waveform = jax.random.normal(k_wave, (B, C, L), dtype=jnp.float32)
    impulse = jax.random.normal(k_imp, (K,), dtype=jnp.float32)

    # p=1.0 so the convolution branch (the kernel) is deterministically taken.
    reverb = Reverb(impulse, p=1.0, seed=0)
    out = jax.block_until_ready(reverb(waveform))
    assert out.shape == (B, C, L + K - 1), out.shape
    assert out.dtype == waveform.dtype

    # Also exercise the multi-N-tile path with tn=128.
    out_small = jax.block_until_ready(
        reverb_fftconvolve_pallas(waveform, impulse, row_tile=8, tn=128))
    assert out_small.shape == (B, C, L + K - 1), out_small.shape

    # Long-impulse case (n_kk = 3): exercises the dynamic resident-band slice.
    L2, K2 = 200, 200
    waveform2 = jax.random.normal(k_wave2, (B, C, L2), dtype=jnp.float32)
    impulse2 = jax.random.normal(k_imp2, (K2,), dtype=jnp.float32)
    out_long = jax.block_until_ready(
        reverb_fftconvolve_pallas(waveform2, impulse2, tn=128))
    assert out_long.shape == (B, C, L2 + K2 - 1), out_long.shape

    # Reference: numpy full convolution per (b, c) row (float64 accumulation).
    def np_ref(wf, imp):
        wf = np.asarray(wf, dtype=np.float64)
        imp = np.asarray(imp, dtype=np.float64)
        return np.stack([
            np.stack([np.convolve(wf[b, c], imp, mode="full") for c in range(wf.shape[1])])
            for b in range(wf.shape[0])
        ])

    ref = np_ref(waveform, impulse)
    ref_long = np_ref(waveform2, impulse2)
    np.testing.assert_allclose(np.asarray(out), ref, rtol=1e-4, atol=1e-4)
    np.testing.assert_allclose(np.asarray(out_small), ref, rtol=1e-4, atol=1e-4)
    np.testing.assert_allclose(np.asarray(out_long), ref_long, rtol=1e-4, atol=1e-4)

    print("KERNEL_OK")
</pallas_src>

<mosaic_0001>
module attributes {stable_mosaic.version = 11 : i64} {
  func.func @kernel(%arg0: i32, %arg1: i32, %arg2: i32, %arg3: memref<8x256xf32, #tpu.memory_space<vmem>>, %arg4: memref<384x256xf32, #tpu.memory_space<vmem>>, %arg5: memref<8x256xf32, #tpu.memory_space<vmem>>, %arg6: memref<8x256xf32, #tpu.memory_space<vmem>>) attributes {dimension_semantics = [#tpu.dimension_semantics<parallel>, #tpu.dimension_semantics<parallel>, #tpu.dimension_semantics<arbitrary>], iteration_bounds = array<i64: 1, 1, 2>, scalar_prefetch = 0 : i64, scratch_operands = 1 : i64, tpu.core_type = #tpu.core_type<tc>, window_params = [{transform_indices = @transform_0, window_bounds = array<i64: 8, 256>}, {pipeline_mode = #tpu.pipeline_mode<synchronous>, transform_indices = @transform_1, window_bounds = array<i64: 384, 256>}, {transform_indices = @transform_2, window_bounds = array<i64: 8, 256>}]} {
    %c0_i32 = arith.constant 0 : i32
    %0 = arith.cmpi eq, %arg2, %c0_i32 : i32
    %1 = arith.extui %0 : i1 to i32
    %c0_i32_0 = arith.constant 0 : i32
    %2 = arith.cmpi ne, %1, %c0_i32_0 : i32
    scf.if %2 {
      %cst = arith.constant 0.000000e+00 : f32
      %9 = vector.broadcast %cst : f32 to vector<8x256xf32>
      %c0 = arith.constant 0 : index
      %c0_4 = arith.constant 0 : index
      %10 = vector.load %arg6[%c0, %c0_4] : memref<8x256xf32, #tpu.memory_space<vmem>>, vector<8x256xf32>
      tpu.vector_store %arg6[%c0, %c0_4], %9 {strides = array<i32>} : memref<8x256xf32, #tpu.memory_space<vmem>>, vector<8x256xf32>,
    } else {
    }
    %c1_i32 = arith.constant 1 : i32
    %3 = arith.cmpi slt, %arg2, %c1_i32 : i32
    %4 = arith.extui %3 : i1 to i32
    %c0_i32_1 = arith.constant 0 : i32
    %5 = arith.cmpi ne, %4, %c0_i32_1 : i32
    scf.if %5 {
      %c256_i32 = arith.constant 256 : i32
      %9 = arith.muli %arg2, %c256_i32 : i32
      %10 = tpu.assume_multiple %9, 256 : i32
      %c0 = arith.constant 0 : index
      %c0_4 = arith.constant 0 : index
      %11 = vector.load %arg6[%c0, %c0_4] : memref<8x256xf32, #tpu.memory_space<vmem>>, vector<8x256xf32>
      %c0_5 = arith.constant 0 : index
      %c0_6 = arith.constant 0 : index
      %12 = vector.load %arg3[%c0_5, %c0_6] : memref<8x256xf32, #tpu.memory_space<vmem>>, vector<8x256xf32>
      %13 = arith.index_cast %10 : i32 to index
      %c0_7 = arith.constant 0 : index
      %14 = vector.load %arg4[%13, %c0_7] : memref<384x256xf32, #tpu.memory_space<vmem>>, vector<256x256xf32>
      %cst = arith.constant dense<0.000000e+00> : vector<8x256xf32>
      %15 = tpu.matmul %12, %14, %cst {dimension_numbers = #tpu.dot_dimension_numbers<[1], [0], [0], [1], [0, 0, 1, 1], [], []>} : vector<8x256xf32>, vector<256x256xf32>, vector<8x256xf32> -> vector<8x256xf32>
      %16 = arith.addf %11, %15 : vector<8x256xf32>
      %c0_8 = arith.constant 0 : index
      %c0_9 = arith.constant 0 : index
      %17 = vector.load %arg6[%c0_8, %c0_9] : memref<8x256xf32, #tpu.memory_space<vmem>>, vector<8x256xf32>
      tpu.vector_store %arg6[%c0_8, %c0_9], %16 {strides = array<i32>} : memref<8x256xf32, #tpu.memory_space<vmem>>, vector<8x256xf32>,
    } else {
    }
    %c1_i32_2 = arith.constant 1 : i32
    %6 = arith.cmpi eq, %arg2, %c1_i32_2 : i32
    %7 = arith.extui %6 : i1 to i32
    %c0_i32_3 = arith.constant 0 : i32
    %8 = arith.cmpi ne, %7, %c0_i32_3 : i32
    scf.if %8 {
      %c0 = arith.constant 0 : index
      %c0_4 = arith.constant 0 : index
      %9 = vector.load %arg6[%c0, %c0_4] : memref<8x256xf32, #tpu.memory_space<vmem>>, vector<8x256xf32>
      %c0_5 = arith.constant 0 : index
      %c0_6 = arith.constant 0 : index
      %10 = vector.load %arg3[%c0_5, %c0_6] : memref<8x256xf32, #tpu.memory_space<vmem>>, vector<8x128xf32>
      %c256 = arith.constant 256 : index
      %c0_7 = arith.constant 0 : index
      %11 = vector.load %arg4[%c256, %c0_7] : memref<384x256xf32, #tpu.memory_space<vmem>>, vector<128x256xf32>
      %cst = arith.constant dense<0.000000e+00> : vector<8x256xf32>
      %12 = tpu.matmul %10, %11, %cst {dimension_numbers = #tpu.dot_dimension_numbers<[1], [0], [0], [1], [0, 0, 1, 1], [], []>} : vector<8x128xf32>, vector<128x256xf32>, vector<8x256xf32> -> vector<8x256xf32>
      %13 = arith.addf %9, %12 : vector<8x256xf32>
      %c0_8 = arith.constant 0 : index
      %c0_9 = arith.constant 0 : index
      %14 = vector.load %arg6[%c0_8, %c0_9] : memref<8x256xf32, #tpu.memory_space<vmem>>, vector<8x256xf32>
      tpu.vector_store %arg6[%c0_8, %c0_9], %13 {strides = array<i32>} : memref<8x256xf32, #tpu.memory_space<vmem>>, vector<8x256xf32>,
      %c0_10 = arith.constant 0 : index
      %c0_11 = arith.constant 0 : index
      %15 = vector.load %arg6[%c0_10, %c0_11] : memref<8x256xf32, #tpu.memory_space<vmem>>, vector<8x256xf32>
      %c0_12 = arith.constant 0 : index
      %c0_13 = arith.constant 0 : index
      %16 = vector.load %arg5[%c0_12, %c0_13] : memref<8x256xf32, #tpu.memory_space<vmem>>, vector<8x256xf32>
      tpu.vector_store %arg5[%c0_12, %c0_13], %15 {strides = array<i32>} : memref<8x256xf32, #tpu.memory_space<vmem>>, vector<8x256xf32>,
    } else {
    }
    return
  }
  func.func @transform_0(%arg0: i32, %arg1: i32, %arg2: i32) -> (i32, i32) {
    %0 = arith.addi %arg1, %arg2 : i32
    %c0_i32 = arith.constant 0 : i32
    return %arg0, %0 : i32, i32
  }
  func.func @transform_1(%arg0: i32, %arg1: i32, %arg2: i32) -> (i32, i32) {
    %c0_i32 = arith.constant 0 : i32
    %c0_i32_0 = arith.constant 0 : i32
    %c0_i32_1 = arith.constant 0 : i32
    return %c0_i32, %c0_i32_0 : i32, i32
  }
  func.func @transform_2(%arg0: i32, %arg1: i32, %arg2: i32) -> (i32, i32) {
    %c0_i32 = arith.constant 0 : i32
    return %arg0, %arg1 : i32, i32
  }
}

</mosaic_0001>

<llo_original>
// kernel: tpu_custom_call.1
$region0: #{tpu_custom_call.1}
  #allocation0 [shape = 'u32[]', space=smem, size = 0x4, offset = 0x4, fixed_abs, tag = 'smem constant byte address 0x4 - core index']
  #allocation1 [shape = 'u32[144,128]{1,0:T(1,128)}', space=vmem, size = 0x12000, scoped, tag = 'internal scratch']
  #allocation2 [shape = 'f32[8,256]{1,0:T(8,128)}', space=vmem, size = 0x2000, scoped, tag = 'scratch operand']
  %s0 = inlined_call_operand.hbm [shape: f32[8,512], index: 0, kind: input, shape index: {}]
  %s1 = inlined_call_operand.hbm [shape: f32[384,256], index: 1, kind: input, shape index: {}]
  %s2 = inlined_call_operand.hbm [shape: f32[8,256], index: 2, kind: output, shape index: {}]
  %s3 = sld [smem:[#allocation0]]
  $region61: #{tpu_custom_call.1} parent=0
    _
  %s5 = ssub.s32 1, %s3
  %s6 = scalar_select 0, %s5, %s3
  $region1: #{tpu_custom_call.1} parent=0
    #allocation3 [shape = 'u8[16384]{0}', space=vmem, size = 0x4000, scoped, tag = 'input window, operand 0']
    #allocation4 [shape = 's32[2]{0}', space=sflag, size = 0x8, scoped, tag = 'scoped memory for tpu_custom_call.1']
    #allocation5 [shape = 's32[2]{0}', space=sflag, size = 0x8, scoped, tag = 'scoped memory for tpu_custom_call.1']
    #allocation6 [shape = 'u8[393216]{0}', space=vmem, size = 0x60000, scoped, tag = 'input window, operand 1, single buffered']
    #allocation7 [shape = 's32[1]{0}', space=sflag, size = 0x4, scoped, tag = 'scoped memory for tpu_custom_call.1']
    #allocation8 [shape = 'u8[8192]{0}', space=vmem, size = 0x2000, scoped, tag = 'output window, operand 0, single buffered']
    %7 = vsyncpa [#allocation4], 0
    %s8 = scalar_lea.sflag [#allocation4], 1
    %9 = vsyncpa %s8, 0
    %10 = vsyncpa [#allocation7], 0
    %11 = vsyncpa [#allocation5], 0
    loop: start=0, step=1, limit=4
    $region2: #{tpu_custom_call.1} parent=1 // loop_pre_header
      _
    $region3: #{tpu_custom_call.1} parent=1 // loop_header
      %s13 = sphi 0, %s17
      %p14 = scmp.ge.s32.totalorder %s13, 4
      %s20 = sphi 0, %s39
      %s21 = sphi 0, %s35
      %s22 = sphi 0, %s31
      %s23 = sphi 0, %s20
      %s24 = sphi 0, %s21
      %s25 = sphi 0, %s22
      %s26 = sphi 0, %s23
      %s27 = sphi 0, %s24
      %s28 = sphi 0, %s25
      %s46 = sphi 0, %s48
      %s49 = sphi 0, %s46
      %s50 = sphi 0, %s49
      %s66 = sphi 0, %s50
      %s70 = sphi 0, %s70
      %s72 = sphi 0, %s70
      %s73 = sphi 0, %s72
      %s87 = sphi 0, %s73
      %s95 = sphi 0, %s97
      %s98 = sphi 0, %s95
      %s99 = sphi 0, %s98
      %s115 = sphi 0, %s99
    $region4: #{tpu_custom_call.1} parent=1 // loop_header_branch
      %16 = sbr.rel (%p14) target = $region8
    $region5: #{tpu_custom_call.1} parent=1 // loop_body
      %s18 = ssub.s32 %s13, 1
      %s19 = ssub.s32 %s13, 2
      %s29 = sadd.s32 1, %s22
      %p30 = scmp.ge.s32.totalorder %s29, 2
      %s31 = scalar_select %p30, 0, %s29
      %s32 = sadd.s32 1, %s21
      %s33 = scalar_select %p30, %s32, %s21
      %p34 = scmp.ge.s32.totalorder %s33, 1
      %s35 = scalar_select %p34, 0, %s33
      %s36 = sadd.s32 1, %s20
      %s37 = scalar_select %p34, %s36, %s20
      %p38 = scmp.ge.s32.totalorder %s37, 1
      %s39 = scalar_select %p38, 0, %s37
      %s40 = sadd.s32 %s21, %s22
      %s41 = sadd.s32 %s35, %s31
      %s42 = ssub.s32 %s20, %s39
      %s43 = ssub.s32 %s40, %s41
      %s44 = sor.u32 %s42, %s43
      %p45 = scmp.eq.s32.totalorder %s44, 0
      %s47 = sadd.s32 %s46, 1
      %s48 = scalar_select %p45, %s46, %s47
      %p51 = pneg %p45
      %p52 = scmp.eq.s32.totalorder %s13, 1
      %p53 = por %p51, %p52
      %p54 = scmp.ne.s32.totalorder %s46, %s49
      %p55 = scmp.eq.s32.totalorder %s13, 0
      %p56 = por %p54, %p55
      %p57 = scmp.ne.s32.totalorder %s46, %s49
      %p58 = scmp.eq.s32.totalorder %s18, 1
      %p59 = por %p57, %p58
      %p60 = scmp.ne.s32.totalorder %s49, %s50
      %p61 = scmp.eq.s32.totalorder %s18, 0
      %p62 = por %p60, %p61
      %p63 = scmp.ne.s32.totalorder %s49, %s50
      %p64 = scmp.eq.s32.totalorder %s19, 1
      %p65 = por %p63, %p64
      %p67 = scmp.ne.s32.totalorder %s50, %s66
      %p68 = scmp.eq.s32.totalorder %s19, 0
      %p69 = por %p67, %p68
      %s71 = sadd.s32 %s70, 1
      %p74 = scmp.eq.s32.totalorder %s13, 1
      %p75 = scmp.ne.s32.totalorder %s70, %s72
      %p76 = scmp.eq.s32.totalorder %s13, 0
      %p77 = por %p75, %p76
      %p78 = scmp.ne.s32.totalorder %s70, %s72
      %p79 = scmp.eq.s32.totalorder %s18, 1
      %p80 = por %p78, %p79
      %p81 = scmp.ne.s32.totalorder %s72, %s73
      %p82 = scmp.eq.s32.totalorder %s18, 0
      %p83 = por %p81, %p82
      %p84 = scmp.ne.s32.totalorder %s72, %s73
      %p85 = scmp.eq.s32.totalorder %s19, 1
      %p86 = por %p84, %p85
      %p88 = scmp.ne.s32.totalorder %s73, %s87
      %p89 = scmp.eq.s32.totalorder %s19, 0
      %p90 = por %p88, %p89
      %s91 = ssub.s32 %s20, %s39
      %s92 = ssub.s32 %s21, %s35
      %s93 = sor.u32 %s91, %s92
      %p94 = scmp.eq.s32.totalorder %s93, 0
      %s96 = sadd.s32 %s95, 1
      %s97 = scalar_select %p94, %s95, %s96
      %p100 = pneg %p94
      %p101 = scmp.eq.s32.totalorder %s13, 1
      %p102 = por %p100, %p101
      %p103 = scmp.ne.s32.totalorder %s95, %s98
      %p104 = scmp.eq.s32.totalorder %s13, 0
      %p105 = por %p103, %p104
      %p106 = scmp.ne.s32.totalorder %s95, %s98
      %p107 = scmp.eq.s32.totalorder %s18, 1
      %p108 = por %p106, %p107
      %p109 = scmp.ne.s32.totalorder %s98, %s99
      %p110 = scmp.eq.s32.totalorder %s18, 0
      %p111 = por %p109, %p110
      %p112 = scmp.ne.s32.totalorder %s98, %s99
      %p113 = scmp.eq.s32.totalorder %s19, 1
      %p114 = por %p112, %p113
      %p116 = scmp.ne.s32.totalorder %s99, %s115
      %p117 = scmp.eq.s32.totalorder %s19, 0
      %p118 = por %p116, %p117
      %p119 = scmp.le.s32.totalorder 1, %s13
      %p120 = scmp.lt.s32.totalorder %s13, 3
      %p121 = pnand %p119, %p120
      %p122 = pneg %p121
      // Predicated region
      $region9: #{tpu_custom_call.1} parent=5 // pred_check
        _
      $region10: #{tpu_custom_call.1} parent=5 // pred_check_branch
        %124 = sbr.rel (%p121) target = $region12
      $region11: #{tpu_custom_call.1} parent=5 // pred_region
        %s125 = ssub.s32 %s13, 1
        // Predicated region
        $region13: #{tpu_custom_call.1} parent=11 // pred_check
          %p126 = pneg %p83
        $region14: #{tpu_custom_call.1} parent=11 // pred_check_branch
          %128 = sbr.rel (%p126) target = $region16
        $region15: #{tpu_custom_call.1} parent=11 // pred_region
          %s130 = ssub.s32 12288, 12288
          %131 = vsyncadd [#allocation7], %s130
          %s132 = sshll.u32 [#allocation6], 4
          %s133 = int_to_ptr.vmem [resolvable:$true] %s132
          %138 = dma.hbm_to_vmem [thread:$0]  %s1, 12288, %s133, [#allocation7], 256, 256, 16
        $region16: #{tpu_custom_call.1} parent=11 // pred_fallthru
          _
      $region12: #{tpu_custom_call.1} parent=5 // pred_fallthru
        _
      %p139 = scmp.lt.s32.totalorder %s13, 2
      // Predicated region
      $region17: #{tpu_custom_call.1} parent=5 // pred_check
        %p140 = pneg %p139
      $region18: #{tpu_custom_call.1} parent=5 // pred_check_branch
        %142 = sbr.rel (%p140) target = $region20
      $region19: #{tpu_custom_call.1} parent=5 // pred_region
        // Predicated region
        $region21: #{tpu_custom_call.1} parent=19 // pred_check
          %p143 = pneg %p56
        $region22: #{tpu_custom_call.1} parent=19 // pred_check_branch
          %145 = sbr.rel (%p143) target = $region24
        $region23: #{tpu_custom_call.1} parent=19 // pred_region
          %s146 = sand.u32 %s46, 1
          %s147 = scalar_lea.sflag [#allocation4], %s146
          %s148 = sand.u32 %s46, 1
          %s149 = smul.addr %s148, 16
          %s150 = scalar_lea.vmem [#allocation3], %s149
          %s151 = sadd.s32 %s21, %s22
          %s152 = smul.u32 2, %s151
          %s154 = ssub.s32 256, 256
          %155 = vsyncadd %s147, %s154
          %s156 = smul.addr %s20, 4
          %s157 = sadd.s32 %s152, %s156
          %s158 = smul.addr %s157, 128
          %s159 = scalar_lea.hbm %s0, %s158
          %s161 = sshll.u32 %s150, 4
          %s162 = int_to_ptr.vmem [resolvable:$true] %s161
          %164 = dma.hbm_to_vmem [thread:$0]  %s159, 256, %s162, %s147
        $region24: #{tpu_custom_call.1} parent=19 // pred_fallthru
          _
      $region20: #{tpu_custom_call.1} parent=5 // pred_fallthru
        _
      %p165 = scmp.le.s32.totalorder 1, %s13
      %p166 = scmp.lt.s32.totalorder %s13, 3
      %p167 = pnand %p165, %p166
      %p168 = pneg %p167
      // Predicated region
      $region25: #{tpu_custom_call.1} parent=5 // pred_check
        _
      $region26: #{tpu_custom_call.1} parent=5 // pred_check_branch
        %170 = sbr.rel (%p167) target = $region28
      $region27: #{tpu_custom_call.1} parent=5 // pred_region
        %s171 = ssub.s32 %s13, 1
        %s172 = sand.u32 %s49, 1
        %s173 = scalar_lea.sflag [#allocation4], %s172
        %s174 = sand.u32 %s49, 1
        %s175 = smul.addr %s174, 16
        %s176 = scalar_lea.vmem [#allocation3], %s175
        // Predicated region
        $region29: #{tpu_custom_call.1} parent=27 // pred_check
          %p177 = pneg %p62
        $region30: #{tpu_custom_call.1} parent=27 // pred_check_branch
          %179 = sbr.rel (%p177) target = $region32
        $region31: #{tpu_custom_call.1} parent=27 // pred_region
          %180 = dma.done %s173, 256
        $region32: #{tpu_custom_call.1} parent=27 // pred_fallthru
          _
        // Predicated region
        $region33: #{tpu_custom_call.1} parent=27 // pred_check
          %p181 = pneg %p83
        $region34: #{tpu_custom_call.1} parent=27 // pred_check_branch
          %183 = sbr.rel (%p181) target = $region36
        $region35: #{tpu_custom_call.1} parent=27 // pred_region
          %184 = dma.done [#allocation7], 12288
        $region36: #{tpu_custom_call.1} parent=27 // pred_fallthru
          _
        %s185 = sand.u32 %s49, 1
        %s186 = scalar_lea.sflag [#allocation4], %s185
        %s187 = sand.u32 %s49, 1
        %s188 = smul.addr %s187, 16
        %s189 = scalar_lea.vmem [#allocation3], %s188
        %p190 = pneg %p62
        %p191 = pneg %p59
        %p192 = pneg %p83
        %p193 = pneg %p80
        %p194 = pneg %p111
        %p195 = pneg %p108
        %s196 = sadd.s32 %s24, %s25
        %s197 = smul.u32 2, %s196
        %s198 = smul.u32 2, %s24
        %p199 = scmp.eq.s32.totalorder %s25, 0
        // Predicated region
        $region37: #{tpu_custom_call.1} parent=27 // pred_check
          %p200 = pneg %p199
        $region38: #{tpu_custom_call.1} parent=27 // pred_check_branch
          %202 = sbr.rel (%p200) target = $region40
        $region39: #{tpu_custom_call.1} parent=27 // pred_region
          %203 = vst [vmem:[#allocation2] sm:$0xff] 0.0
          %204 = vst [vmem:[#allocation2 + $0x8] sm:$0xff] 0.0
        $region40: #{tpu_custom_call.1} parent=27 // pred_fallthru
          _
        %p205 = scmp.lt.s32.totalorder %s25, 1
        // Predicated region
        $region41: #{tpu_custom_call.1} parent=27 // pred_check
          %p206 = pneg %p205
        $region42: #{tpu_custom_call.1} parent=27 // pred_check_branch
          %208 = sbr.rel (%p206) target = $region44
        $region43: #{tpu_custom_call.1} parent=27 // pred_region
          %s209 = smul.u32 %s25, 256
          %v210 = vld [vmem:[#allocation2] sm:$0xff]
          %v211 = vld [vmem:[#allocation2 + $0x8] sm:$0xff]
          %v212 = vld [vmem:[%s176] sm:$0xff]
          %v213 = vld [vmem:[%s176 + $0x8] sm:$0xff]
          %s214 = sshra.s32 %s209, 3
          %s215 = sand.u32 %s209, 7
          %s216 = smul.u32 %s214, 2
          %s217 = smul.addr %s216, 8
          %s218 = scalar_lea.vmem [#allocation6], %s217
          %v219 = vld [vmem:[%s218] sm:$0xff]
          %v220 = vld [vmem:[%s218 + $0x8] sm:$0xff]
          %v221 = vld [vmem:[%s218 + $0x10] sm:$0xff]
          %v222 = vld [vmem:[%s218 + $0x18] sm:$0xff]
          %v223 = vld [vmem:[%s218 + $0x20] sm:$0xff]
          %v224 = vld [vmem:[%s218 + $0x28] sm:$0xff]
          %v225 = vld [vmem:[%s218 + $0x30] sm:$0xff]
          %v226 = vld [vmem:[%s218 + $0x38] sm:$0xff]
          %v227 = vld [vmem:[%s218 + $0x40] sm:$0xff]
          %v228 = vld [vmem:[%s218 + $0x48] sm:$0xff]
          %v229 = vld [vmem:[%s218 + $0x50] sm:$0xff]
          %v230 = vld [vmem:[%s218 + $0x58] sm:$0xff]
          %v231 = vld [vmem:[%s218 + $0x60] sm:$0xff]
          %v232 = vld [vmem:[%s218 + $0x68] sm:$0xff]
          %v233 = vld [vmem:[%s218 + $0x70] sm:$0xff]
          %v234 = vld [vmem:[%s218 + $0x78] sm:$0xff]
          %v235 = vld [vmem:[%s218 + $0x80] sm:$0xff]
          %v236 = vld [vmem:[%s218 + $0x88] sm:$0xff]
          %v237 = vld [vmem:[%s218 + $0x90] sm:$0xff]
          %v238 = vld [vmem:[%s218 + $0x98] sm:$0xff]
          %v239 = vld [vmem:[%s218 + $0xa0] sm:$0xff]
          %v240 = vld [vmem:[%s218 + $0xa8] sm:$0xff]
          %v241 = vld [vmem:[%s218 + $0xb0] sm:$0xff]
          %v242 = vld [vmem:[%s218 + $0xb8] sm:$0xff]
          %v243 = vld [vmem:[%s218 + $0xc0] sm:$0xff]
          %v244 = vld [vmem:[%s218 + $0xc8] sm:$0xff]
          %v245 = vld [vmem:[%s218 + $0xd0] sm:$0xff]
          %v246 = vld [vmem:[%s218 + $0xd8] sm:$0xff]
          %v247 = vld [vmem:[%s218 + $0xe0] sm:$0xff]
          %v248 = vld [vmem:[%s218 + $0xe8] sm:$0xff]
          %v249 = vld [vmem:[%s218 + $0xf0] sm:$0xff]
          %v250 = vld [vmem:[%s218 + $0xf8] sm:$0xff]
          %v251 = vld [vmem:[%s218 + $0x100] sm:$0xff]
          %v252 = vld [vmem:[%s218 + $0x108] sm:$0xff]
          %v253 = vld [vmem:[%s218 + $0x110] sm:$0xff]
          %v254 = vld [vmem:[%s218 + $0x118] sm:$0xff]
          %v255 = vld [vmem:[%s218 + $0x120] sm:$0xff]
          %v256 = vld [vmem:[%s218 + $0x128] sm:$0xff]
          %v257 = vld [vmem:[%s218 + $0x130] sm:$0xff]
          %v258 = vld [vmem:[%s218 + $0x138] sm:$0xff]
          %v259 = vld [vmem:[%s218 + $0x140] sm:$0xff]
          %v260 = vld [vmem:[%s218 + $0x148] sm:$0xff]
          %v261 = vld [vmem:[%s218 + $0x150] sm:$0xff]
          %v262 = vld [vmem:[%s218 + $0x158] sm:$0xff]
          %v263 = vld [vmem:[%s218 + $0x160] sm:$0xff]
          %v264 = vld [vmem:[%s218 + $0x168] sm:$0xff]
          %v265 = vld [vmem:[%s218 + $0x170] sm:$0xff]
          %v266 = vld [vmem:[%s218 + $0x178] sm:$0xff]
          %v267 = vld [vmem:[%s218 + $0x180] sm:$0xff]
          %v268 = vld [vmem:[%s218 + $0x188] sm:$0xff]
          %v269 = vld [vmem:[%s218 + $0x190] sm:$0xff]
          %v270 = vld [vmem:[%s218 + $0x198] sm:$0xff]
          %v271 = vld [vmem:[%s218 + $0x1a0] sm:$0xff]
          %v272 = vld [vmem:[%s218 + $0x1a8] sm:$0xff]
          %v273 = vld [vmem:[%s218 + $0x1b0] sm:$0xff]
          %v274 = vld [vmem:[%s218 + $0x1b8] sm:$0xff]
          %v275 = vld [vmem:[%s218 + $0x1c0] sm:$0xff]
          %v276 = vld [vmem:[%s218 + $0x1c8] sm:$0xff]
          %v277 = vld [vmem:[%s218 + $0x1d0] sm:$0xff]
          %v278 = vld [vmem:[%s218 + $0x1d8] sm:$0xff]
          %v279 = vld [vmem:[%s218 + $0x1e0] sm:$0xff]
          %v280 = vld [vmem:[%s218 + $0x1e8] sm:$0xff]
          %v281 = vld [vmem:[%s218 + $0x1f0] sm:$0xff]
          %v282 = vld [vmem:[%s218 + $0x1f8] sm:$0xff]
          %283 = vmatprep.subr.mxu0 %v220
          %284 = vmatpush1.msra.mxu0 %v219
          %285 = vmatprep.subr.mxu0 %v222
          %286 = vmatpush1.msra.mxu0 %v221
          %287 = vmatprep.subr.mxu0 %v224
          %288 = vmatpush1.msra.mxu0 %v223
          %289 = vmatprep.subr.mxu0 %v226
          %290 = vmatpush1.msra.mxu0 %v225
          %291 = vmatprep.subr.mxu0 %v228
          %292 = vmatpush1.msra.mxu0 %v227
          %293 = vmatprep.subr.mxu0 %v230
          %294 = vmatpush1.msra.mxu0 %v229
          %295 = vmatprep.subr.mxu0 %v232
          %296 = vmatpush1.msra.mxu0 %v231
          %297 = vmatprep.subr.mxu0 %v234
          %298 = vmatpush1.msra.mxu0 %v233
          %299 = vmatprep.subr.mxu0 %v236
          %300 = vmatpush1.msra.mxu0 %v235
          %301 = vmatprep.subr.mxu0 %v238
          %302 = vmatpush1.msra.mxu0 %v237
          %303 = vmatprep.subr.mxu0 %v240
          %304 = vmatpush1.msra.mxu0 %v239
          %305 = vmatprep.subr.mxu0 %v242
          %306 = vmatpush1.msra.mxu0 %v241
          %307 = vmatprep.subr.mxu0 %v244
          %308 = vmatpush1.msra.mxu0 %v243
          %309 = vmatprep.subr.mxu0 %v246
          %310 = vmatpush1.msra.mxu0 %v245
          %311 = vmatprep.subr.mxu0 %v248
          %312 = vmatpush1.msra.mxu0 %v247
          %313 = vmatprep.subr.mxu0 %v250
          %314 = vmatpush1.msra.mxu0 %v249
          %315 = vmatprep.subr.mxu0 %v252
          %316 = vmatpush1.msra.mxu0 %v251
          %317 = vmatprep.subr.mxu0 %v254
          %318 = vmatpush1.msra.mxu0 %v253
          %319 = vmatprep.subr.mxu0 %v256
          %320 = vmatpush1.msra.mxu0 %v255
          %321 = vmatprep.subr.mxu0 %v258
          %322 = vmatpush1.msra.mxu0 %v257
          %323 = vmatprep.subr.mxu0 %v260
          %324 = vmatpush1.msra.mxu0 %v259
          %325 = vmatprep.subr.mxu0 %v262
          %326 = vmatpush1.msra.mxu0 %v261
          %327 = vmatprep.subr.mxu0 %v264
          %328 = vmatpush1.msra.mxu0 %v263
          %329 = vmatprep.subr.mxu0 %v266
          %330 = vmatpush1.msra.mxu0 %v265
          %331 = vmatprep.subr.mxu0 %v268
          %332 = vmatpush1.msra.mxu0 %v267
          %333 = vmatprep.subr.mxu0 %v270
          %334 = vmatpush1.msra.mxu0 %v269
          %335 = vmatprep.subr.mxu0 %v272
          %336 = vmatpush1.msra.mxu0 %v271
          %337 = vmatprep.subr.mxu0 %v274
          %338 = vmatpush1.msra.mxu0 %v273
          %339 = vmatprep.subr.mxu0 %v276
          %340 = vmatpush1.msra.mxu0 %v275
          %341 = vmatprep.subr.mxu0 %v278
          %342 = vmatpush1.msra.mxu0 %v277
          %343 = vmatprep.subr.mxu0 %v280
          %344 = vmatpush1.msra.mxu0 %v279
          %345 = vmatprep.subr.mxu0 %v282
          %346 = vmatpush1.msra.mxu0 %v281
          %347 = vmatprep.mubr.f32.mxu0 %v213
          %348 = vmatmul.mubr.f32.gmra.mrb[0].mxu0 %v212
          %v349 = vpop.f32.mrb[0].mxu0
          %v350 = vadd.f32 0.0, %v349
          %v351 = vpop.f32.mrb[0].mxu0
          %v352 = vadd.f32 0.0, %v351
          %353 = vdwg.mxu0
          %v354 = vadd.f32 %v210, %v350
          %v355 = vadd.f32 %v211, %v352
          %356 = vst [vmem:[#allocation2] sm:$0xff] %v354
          %357 = vst [vmem:[#allocation2 + $0x8] sm:$0xff] %v355
        $region44: #{tpu_custom_call.1} parent=27 // pred_fallthru
          _
        %p358 = scmp.eq.s32.totalorder %s25, 1
        // Predicated region
        $region45: #{tpu_custom_call.1} parent=27 // pred_check
          %p359 = pneg %p358
        $region46: #{tpu_custom_call.1} parent=27 // pred_check_branch
          %361 = sbr.rel (%p359) target = $region48
        $region47: #{tpu_custom_call.1} parent=27 // pred_region
          %v362 = vld [vmem:[#allocation2] sm:$0xff]
          %v363 = vld [vmem:[#allocation2 + $0x8] sm:$0xff]
          %v364 = vld [vmem:[%s176] sm:$0xff]
          %v365 = vld [vmem:[#allocation6 + $0x200] sm:$0xff]
          %v366 = vld [vmem:[#allocation6 + $0x208] sm:$0xff]
          %v367 = vld [vmem:[#allocation6 + $0x210] sm:$0xff]
          %v368 = vld [vmem:[#allocation6 + $0x218] sm:$0xff]
          %v369 = vld [vmem:[#allocation6 + $0x220] sm:$0xff]
          %v370 = vld [vmem:[#allocation6 + $0x228] sm:$0xff]
          %v371 = vld [vmem:[#allocation6 + $0x230] sm:$0xff]
          %v372 = vld [vmem:[#allocation6 + $0x238] sm:$0xff]
          %v373 = vld [vmem:[#allocation6 + $0x240] sm:$0xff]
          %v374 = vld [vmem:[#allocation6 + $0x248] sm:$0xff]
          %v375 = vld [vmem:[#allocation6 + $0x250] sm:$0xff]
          %v376 = vld [vmem:[#allocation6 + $0x258] sm:$0xff]
          %v377 = vld [vmem:[#allocation6 + $0x260] sm:$0xff]
          %v378 = vld [vmem:[#allocation6 + $0x268] sm:$0xff]
          %v379 = vld [vmem:[#allocation6 + $0x270] sm:$0xff]
          %v380 = vld [vmem:[#allocation6 + $0x278] sm:$0xff]
          %v381 = vld [vmem:[#allocation6 + $0x280] sm:$0xff]
          %v382 = vld [vmem:[#allocation6 + $0x288] sm:$0xff]
          %v383 = vld [vmem:[#allocation6 + $0x290] sm:$0xff]
          %v384 = vld [vmem:[#allocation6 + $0x298] sm:$0xff]
          %v385 = vld [vmem:[#allocation6 + $0x2a0] sm:$0xff]
          %v386 = vld [vmem:[#allocation6 + $0x2a8] sm:$0xff]
          %v387 = vld [vmem:[#allocation6 + $0x2b0] sm:$0xff]
          %v388 = vld [vmem:[#allocation6 + $0x2b8] sm:$0xff]
          %v389 = vld [vmem:[#allocation6 + $0x2c0] sm:$0xff]
          %v390 = vld [vmem:[#allocation6 + $0x2c8] sm:$0xff]
          %v391 = vld [vmem:[#allocation6 + $0x2d0] sm:$0xff]
          %v392 = vld [vmem:[#allocation6 + $0x2d8] sm:$0xff]
          %v393 = vld [vmem:[#allocation6 + $0x2e0] sm:$0xff]
          %v394 = vld [vmem:[#allocation6 + $0x2e8] sm:$0xff]
          %v395 = vld [vmem:[#allocation6 + $0x2f0] sm:$0xff]
          %v396 = vld [vmem:[#allocation6 + $0x2f8] sm:$0xff]
          %397 = vmatprep.subr.mxu0 %v366
          %398 = vmatpush1.msra.mxu0 %v365
          %399 = vmatprep.subr.mxu0 %v368
          %400 = vmatpush1.msra.mxu0 %v367
          %401 = vmatprep.subr.mxu0 %v370
          %402 = vmatpush1.msra.mxu0 %v369
          %403 = vmatprep.subr.mxu0 %v372
          %404 = vmatpush1.msra.mxu0 %v371
          %405 = vmatprep.subr.mxu0 %v374
          %406 = vmatpush1.msra.mxu0 %v373
          %407 = vmatprep.subr.mxu0 %v376
          %408 = vmatpush1.msra.mxu0 %v375
          %409 = vmatprep.subr.mxu0 %v378
          %410 = vmatpush1.msra.mxu0 %v377
          %411 = vmatprep.subr.mxu0 %v380
          %412 = vmatpush1.msra.mxu0 %v379
          %413 = vmatprep.subr.mxu0 %v382
          %414 = vmatpush1.msra.mxu0 %v381
          %415 = vmatprep.subr.mxu0 %v384
          %416 = vmatpush1.msra.mxu0 %v383
          %417 = vmatprep.subr.mxu0 %v386
          %418 = vmatpush1.msra.mxu0 %v385
          %419 = vmatprep.subr.mxu0 %v388
          %420 = vmatpush1.msra.mxu0 %v387
          %421 = vmatprep.subr.mxu0 %v390
          %422 = vmatpush1.msra.mxu0 %v389
          %423 = vmatprep.subr.mxu0 %v392
          %424 = vmatpush1.msra.mxu0 %v391
          %425 = vmatprep.subr.mxu0 %v394
          %426 = vmatpush1.msra.mxu0 %v393
          %427 = vmatprep.subr.mxu0 %v396
          %428 = vmatpush1.msra.mxu0 %v395
          %429 = vmatprep.subr.mxu0 0.0
          %430 = vmatpush1.msra.mxu0 0.0
          %431 = vmatprep.subr.mxu0 0.0
          %432 = vmatpush1.msra.mxu0 0.0
          %433 = vmatprep.subr.mxu0 0.0
          %434 = vmatpush1.msra.mxu0 0.0
          %435 = vmatprep.subr.mxu0 0.0
          %436 = vmatpush1.msra.mxu0 0.0
          %437 = vmatprep.subr.mxu0 0.0
          %438 = vmatpush1.msra.mxu0 0.0
          %439 = vmatprep.subr.mxu0 0.0
          %440 = vmatpush1.msra.mxu0 0.0
          %441 = vmatprep.subr.mxu0 0.0
          %442 = vmatpush1.msra.mxu0 0.0
          %443 = vmatprep.subr.mxu0 0.0
          %444 = vmatpush1.msra.mxu0 0.0
          %445 = vmatprep.subr.mxu0 0.0
          %446 = vmatpush1.msra.mxu0 0.0
          %447 = vmatprep.subr.mxu0 0.0
          %448 = vmatpush1.msra.mxu0 0.0
          %449 = vmatprep.subr.mxu0 0.0
          %450 = vmatpush1.msra.mxu0 0.0
          %451 = vmatprep.subr.mxu0 0.0
          %452 = vmatpush1.msra.mxu0 0.0
          %453 = vmatprep.subr.mxu0 0.0
          %454 = vmatpush1.msra.mxu0 0.0
          %455 = vmatprep.subr.mxu0 0.0
          %456 = vmatpush1.msra.mxu0 0.0
          %457 = vmatprep.subr.mxu0 0.0
          %458 = vmatpush1.msra.mxu0 0.0
          %459 = vmatprep.subr.mxu0 0.0
          %460 = vmatpush1.msra.mxu0 0.0
          %461 = vmatprep.mubr.f32.mxu0 0.0
          %462 = vmatmul.mubr.f32.gmra.mrb[0].mxu0 %v364
          %v463 = vpop.f32.mrb[0].mxu0
          %v464 = vadd.f32 0.0, %v463
          %v465 = vpop.f32.mrb[0].mxu0
          %v466 = vadd.f32 0.0, %v465
          %467 = vdwg.mxu0
          %v468 = vadd.f32 %v362, %v464
          %v469 = vadd.f32 %v363, %v466
          %470 = vst [vmem:[#allocation2] sm:$0xff] %v468
          %471 = vst [vmem:[#allocation2 + $0x8] sm:$0xff] %v469
          %v472 = vld [vmem:[#allocation2] sm:$0xff]
          %v473 = vld [vmem:[#allocation2 + $0x8] sm:$0xff]
          %474 = vst [vmem:[#allocation8] sm:$0xff] %v472
          %475 = vst [vmem:[#allocation8 + $0x8] sm:$0xff] %v473
        $region48: #{tpu_custom_call.1} parent=27 // pred_fallthru
          _
        // Predicated region
        $region49: #{tpu_custom_call.1} parent=27 // pred_check
          %p476 = pneg %p108
        $region50: #{tpu_custom_call.1} parent=27 // pred_check_branch
          %478 = sbr.rel (%p476) target = $region52
        $region51: #{tpu_custom_call.1} parent=27 // pred_region
          %s479 = smul.u32 2, %s24
          %s481 = ssub.s32 256, 256
          %482 = vsyncadd [#allocation5], %s481
          %s483 = smul.addr %s23, 2
          %s484 = sadd.s32 %s479, %s483
          %s485 = smul.addr %s484, 128
          %s486 = scalar_lea.hbm %s2, %s485
          %s488 = sshll.u32 [#allocation8], 4
          %s489 = int_to_ptr.vmem [resolvable:$true] %s488
          %491 = dma.vmem_to_hbm [thread:$0]  %s489, 256, %s486, [#allocation5]
        $region52: #{tpu_custom_call.1} parent=27 // pred_fallthru
          _
        // Predicated region
        $region53: #{tpu_custom_call.1} parent=27 // pred_check
          %p492 = pneg %p108
        $region54: #{tpu_custom_call.1} parent=27 // pred_check_branch
          %494 = sbr.rel (%p492) target = $region56
        $region55: #{tpu_custom_call.1} parent=27 // pred_region
          %495 = dma.done [#allocation5], 256
        $region56: #{tpu_custom_call.1} parent=27 // pred_fallthru
          _
      $region28: #{tpu_custom_call.1} parent=5 // pred_fallthru
        _
      %p496 = scmp.le.s32.totalorder 2, %s13
      // Predicated region
      $region57: #{tpu_custom_call.1} parent=5 // pred_check
        %p497 = pneg %p496
      $region58: #{tpu_custom_call.1} parent=5 // pred_check_branch
        %499 = sbr.rel (%p497) target = $region60
      $region59: #{tpu_custom_call.1} parent=5 // pred_region
        %s500 = ssub.s32 %s13, 2
      $region60: #{tpu_custom_call.1} parent=5 // pred_fallthru
        _
    $region6: #{tpu_custom_call.1} parent=1 // loop_footer
      %s17 = sadd.s32 1, %s13
    $region7: #{tpu_custom_call.1} parent=1 // loop_footer_branch
      %12 = sbr.rel target = $region3
    $region8: #{tpu_custom_call.1} parent=1 // loop_exit
      _
    %501 = vsyncpa [#allocation4], 1
    %s502 = scalar_lea.sflag [#allocation4], 1
    %503 = vsyncpa %s502, 1
    %504 = vsyncpa [#allocation7], 1
    %505 = vsyncpa [#allocation5], 1
    %s506 = scalar_lea.sflag [#allocation5], 1
    %507 = vsyncpa %s506, 1

</llo_original>
